<compile_context>
chip_gen: v5e
topology: v5e:2x2
jax: 0.10.0
libtpu: 0.0.40
codegen_flags: <defaults>
</compile_context>

<pallas_src>
import math

import jax
import jax.numpy as jnp
from jax.experimental import pallas as pl
from jax.experimental.pallas import tpu as pltpu


def make_positional_encoding_table(d_model: int, max_len: int = 5000) -> jnp.ndarray:
    """Deterministic sinusoidal table, shape (max_len, 1, d_model), float32."""
    position = jnp.arange(0, max_len, dtype=jnp.float32)[:, None]            # (max_len, 1)
    div_term = jnp.exp(
        jnp.arange(0, d_model, 2, dtype=jnp.float32) * (-math.log(10000.0) / d_model)
    )                                                                         # (d_model//2,)
    pe = jnp.zeros((max_len, d_model), dtype=jnp.float32)
    pe = pe.at[:, 0::2].set(jnp.sin(position * div_term))
    pe = pe.at[:, 1::2].set(jnp.cos(position * div_term))
    # .unsqueeze(0).transpose(0, 1)  ->  (max_len, 1, d_model)
    return pe[:, None, :]


def _pe_add_kernel(x_ref, pe_ref, o_ref):
    # x_ref/o_ref: (tile_s, B, D); pe_ref: (tile_s, 1, D) -> broadcast over batch.
    o_ref[...] = (x_ref[...] + pe_ref[...]).astype(o_ref.dtype)


def _vmem_budgets():
    """(per_buffer_bytes, vmem_limit_bytes) tuned per TPU generation."""
    try:
        vmem_cap = int(pltpu.get_tpu_info().vmem_capacity_bytes)
    except Exception:
        vmem_cap = 64 * 1024 * 1024  # conservative (v7x-sized) fallback
    if vmem_cap >= 96 * 1024 * 1024:          # v5e / v6e: 128 MiB physical VMEM
        return 12 * 1024 * 1024, 80 * 1024 * 1024
    else:                                     # v7x: 64 MiB per TensorCore
        return 6 * 1024 * 1024, 48 * 1024 * 1024


def _choose_tile_s(S: int, B: int, D: int, dtype, per_buffer_bytes: int) -> int:
    """Largest seq-tile whose (tile_s, B_padded, D) slab fits the byte budget."""
    itemsize = jnp.dtype(dtype).itemsize
    sub = max(8, 32 // itemsize)                       # sublane multiple: 8/16/32
    b_pad = ((B + sub - 1) // sub) * sub               # HW pads the sublane axis
    bytes_per_row = b_pad * D * itemsize
    tile_s = max(1, per_buffer_bytes // bytes_per_row)
    tile_s = min(tile_s, S)
    if 8 < tile_s < S:                                  # tidy DMA sizes (not required)
        tile_s = (tile_s // 8) * 8
    # Guarantee >= 2 grid steps so the "parallel" axis can feed both v7x TCs.
    if tile_s >= S and S >= 2:
        tile_s = (S + 1) // 2
    return tile_s


def positional_encoding_forward(x: jnp.ndarray, pe: jnp.ndarray,
                                *, alias_input: bool = False) -> jnp.ndarray:
    """x: (seq_len, batch, d_model); pe: (max_len, 1, d_model)."""
    max_len = pe.shape[0]
    if x.shape[0] > max_len:                 # same truncation as the PyTorch module
        x = x[:max_len]

    S, B, D = x.shape
    out_dtype = jnp.result_type(x.dtype, pe.dtype)   # PyTorch-style type promotion
    x_p = x.astype(out_dtype)
    pe_p = pe[:S].astype(out_dtype)                  # (S, 1, D)

    # Lane-dense output: pad d_model up to a multiple of 128 so stores are
    # unmasked full-lane vst (biggest single lever for mem-bound kernels).
    # For very small d_model a caller may prefer to skip this (padding adds an
    # XLA pad/slice copy); the demo uses D=128 so this path is a no-op.
    Dp = ((D + 127) // 128) * 128
    if Dp != D:
        x_p = jnp.pad(x_p, ((0, 0), (0, 0), (0, Dp - D)))
        pe_p = jnp.pad(pe_p, ((0, 0), (0, 0), (0, Dp - D)))

    per_buffer_bytes, vmem_limit_bytes = _vmem_budgets()
    tile_s = _choose_tile_s(S, B, Dp, out_dtype, per_buffer_bytes)

    itemsize = jnp.dtype(out_dtype).itemsize
    cost = pl.CostEstimate(
        flops=S * B * Dp,
        bytes_accessed=2 * S * B * Dp * itemsize + S * Dp * itemsize,
        transcendentals=0,
    )

    out = pl.pallas_call(
        _pe_add_kernel,
        out_shape=jax.ShapeDtypeStruct((S, B, Dp), out_dtype),
        grid=(pl.cdiv(S, tile_s),),
        in_specs=[
            # Contiguous (tile_s, B, D) slab per step; B and Dp are full axes.
            pl.BlockSpec((tile_s, B, Dp), lambda i: (i, 0, 0)),
            # pe: one row per sequence position, broadcast over batch in-kernel.
            pl.BlockSpec((tile_s, 1, Dp), lambda i: (i, 0, 0)),
        ],
        out_specs=pl.BlockSpec((tile_s, B, Dp), lambda i: (i, 0, 0)),
        compiler_params=pltpu.CompilerParams(
            dimension_semantics=("parallel",),
            vmem_limit_bytes=vmem_limit_bytes,
        ),
        cost_estimate=cost,
        # In-place add when embedded in a model (x buffer reused for output).
        input_output_aliases=({0: 0} if alias_input else {}),
    )(x_p, pe_p)

    if Dp != D:
        out = out[:, :, :D]
    return out


if __name__ == "__main__":
    d_model = 128     # multiple of 128 -> fully lane-dense tiles, no padding path
    max_len = 512
    seq_len = 64
    batch = 4

    pe = make_positional_encoding_table(d_model, max_len)

    key = jax.random.PRNGKey(0)
    x = jax.random.normal(key, (seq_len, batch, d_model), dtype=jnp.float32)

    out = positional_encoding_forward(x, pe)
    out = jax.block_until_ready(out)

    # Reference check (plain JAX, same math as the PyTorch forward).
    ref = x + pe[:seq_len]
    assert out.shape == (seq_len, batch, d_model)
    assert jnp.allclose(out, ref, atol=1e-6), "mismatch vs reference"

    print("KERNEL_OK")
</pallas_src>

<mosaic_0001>
module attributes {stable_mosaic.version = 11 : i64} {
  func.func @_pe_add_kernel(%arg0: i32, %arg1: memref<32x4x128xf32, #tpu.memory_space<vmem>>, %arg2: memref<32x1x128xf32, #tpu.memory_space<vmem>>, %arg3: memref<32x4x128xf32, #tpu.memory_space<vmem>>) attributes {dimension_semantics = [#tpu.dimension_semantics<parallel>], iteration_bounds = array<i64: 2>, scalar_prefetch = 0 : i64, scratch_operands = 0 : i64, tpu.core_type = #tpu.core_type<tc>, window_params = [{transform_indices = @transform_0, window_bounds = array<i64: 32, 4, 128>}, {transform_indices = @transform_1, window_bounds = array<i64: 32, 1, 128>}, {transform_indices = @transform_2, window_bounds = array<i64: 32, 4, 128>}]} {
    %c0 = arith.constant 0 : index
    %c0_0 = arith.constant 0 : index
    %c0_1 = arith.constant 0 : index
    %0 = vector.load %arg1[%c0, %c0_0, %c0_1] : memref<32x4x128xf32, #tpu.memory_space<vmem>>, vector<32x4x128xf32>
    %c0_2 = arith.constant 0 : index
    %c0_3 = arith.constant 0 : index
    %c0_4 = arith.constant 0 : index
    %1 = vector.load %arg2[%c0_2, %c0_3, %c0_4] : memref<32x1x128xf32, #tpu.memory_space<vmem>>, vector<32x1x128xf32>
    %2 = vector.broadcast %1 : vector<32x1x128xf32> to vector<32x4x128xf32>
    %3 = arith.addf %0, %2 : vector<32x4x128xf32>
    %c0_5 = arith.constant 0 : index
    %c0_6 = arith.constant 0 : index
    %c0_7 = arith.constant 0 : index
    %4 = vector.load %arg3[%c0_5, %c0_6, %c0_7] : memref<32x4x128xf32, #tpu.memory_space<vmem>>, vector<32x4x128xf32>
    tpu.vector_store %arg3[%c0_5, %c0_6, %c0_7], %3 {strides = array<i32>} : memref<32x4x128xf32, #tpu.memory_space<vmem>>, vector<32x4x128xf32>,
    return
  }
  func.func @transform_0(%arg0: i32) -> (i32, i32, i32) {
    %c0_i32 = arith.constant 0 : i32
    %c0_i32_0 = arith.constant 0 : i32
    %c0_i32_1 = arith.constant 0 : i32
    return %arg0, %c0_i32, %c0_i32_0 : i32, i32, i32
  }
  func.func @transform_1(%arg0: i32) -> (i32, i32, i32) {
    %c0_i32 = arith.constant 0 : i32
    %c0_i32_0 = arith.constant 0 : i32
    %c0_i32_1 = arith.constant 0 : i32
    return %arg0, %c0_i32, %c0_i32_0 : i32, i32, i32
  }
  func.func @transform_2(%arg0: i32) -> (i32, i32, i32) {
    %c0_i32 = arith.constant 0 : i32
    %c0_i32_0 = arith.constant 0 : i32
    %c0_i32_1 = arith.constant 0 : i32
    return %arg0, %c0_i32, %c0_i32_0 : i32, i32, i32
  }
}

</mosaic_0001>

<llo_original>
// kernel: tpu_custom_call.1
$region0: #{tpu_custom_call.1}
  #allocation0 [shape = 'u32[]', space=smem, size = 0x4, offset = 0x4, fixed_abs, tag = 'smem constant byte address 0x4 - core index']
  #allocation1 [shape = 'u32[72,128]{1,0:T(1,128)}', space=vmem, size = 0x9000, scoped, tag = 'internal scratch']
  %s0 = inlined_call_operand.hbm [shape: f32[64,4,128], index: 0, kind: input, shape index: {}]
  %s1 = inlined_call_operand.hbm [shape: f32[64,1,128], index: 1, kind: input, shape index: {}]
  %s2 = inlined_call_operand.hbm [shape: f32[64,4,128], index: 2, kind: output, shape index: {}]
  %s3 = sld [smem:[#allocation0]]
  $region49: #{tpu_custom_call.1} parent=0
    _
  %s5 = ssub.s32 1, %s3
  %s6 = scalar_select 0, %s5, %s3
  $region1: #{tpu_custom_call.1} parent=0
    #allocation2 [shape = 'u8[131072]{0}', space=vmem, size = 0x20000, scoped, tag = 'input window, operand 0']
    #allocation3 [shape = 's32[2]{0}', space=sflag, size = 0x8, scoped, tag = 'scoped memory for tpu_custom_call.1']
    #allocation4 [shape = 's32[2]{0}', space=sflag, size = 0x8, scoped, tag = 'scoped memory for tpu_custom_call.1']
    #allocation5 [shape = 'u8[32768]{0}', space=vmem, size = 0x8000, scoped, tag = 'input window, operand 1']
    #allocation6 [shape = 's32[2]{0}', space=sflag, size = 0x8, scoped, tag = 'scoped memory for tpu_custom_call.1']
    #allocation7 [shape = 'u8[131072]{0}', space=vmem, size = 0x20000, scoped, tag = 'output window, operand 0']
    %7 = vsyncpa [#allocation3], 0
    %s8 = scalar_lea.sflag [#allocation3], 1
    %9 = vsyncpa %s8, 0
    %10 = vsyncpa [#allocation6], 0
    %s11 = scalar_lea.sflag [#allocation6], 1
    %12 = vsyncpa %s11, 0
    %13 = vsyncpa [#allocation4], 0
    %s14 = scalar_lea.sflag [#allocation4], 1
    %15 = vsyncpa %s14, 0
    loop: start=0, step=1, limit=4
    $region2: #{tpu_custom_call.1} parent=1 // loop_pre_header
      _
    $region3: #{tpu_custom_call.1} parent=1 // loop_header
      %s17 = sphi 0, %s21
      %p18 = scmp.ge.s32.totalorder %s17, 4
      %s27 = sphi 0, %s29
      %s30 = sphi 0, %s27
      %s31 = sphi 0, %s30
      %s47 = sphi 0, %s31
      %s53 = sphi 0, %s55
      %s56 = sphi 0, %s53
      %s57 = sphi 0, %s56
      %s73 = sphi 0, %s57
      %s79 = sphi 0, %s81
      %s82 = sphi 0, %s79
      %s83 = sphi 0, %s82
      %s99 = sphi 0, %s83
    $region4: #{tpu_custom_call.1} parent=1 // loop_header_branch
      %20 = sbr.rel (%p18) target = $region8
    $region5: #{tpu_custom_call.1} parent=1 // loop_body
      %s22 = ssub.s32 %s17, 1
      %s23 = ssub.s32 %s17, 2
      %s24 = sadd.s32 %s17, 1
      %s25 = ssub.s32 %s17, %s24
      %p26 = scmp.eq.s32.totalorder %s25, 0
      %s28 = sadd.s32 %s27, 1
      %s29 = scalar_select %p26, %s27, %s28
      %p32 = pneg %p26
      %p33 = scmp.eq.s32.totalorder %s17, 1
      %p34 = por %p32, %p33
      %p35 = scmp.ne.s32.totalorder %s27, %s30
      %p36 = scmp.eq.s32.totalorder %s17, 0
      %p37 = por %p35, %p36
      %p38 = scmp.ne.s32.totalorder %s27, %s30
      %p39 = scmp.eq.s32.totalorder %s22, 1
      %p40 = por %p38, %p39
      %p41 = scmp.ne.s32.totalorder %s30, %s31
      %p42 = scmp.eq.s32.totalorder %s22, 0
      %p43 = por %p41, %p42
      %p44 = scmp.ne.s32.totalorder %s30, %s31
      %p45 = scmp.eq.s32.totalorder %s23, 1
      %p46 = por %p44, %p45
      %p48 = scmp.ne.s32.totalorder %s31, %s47
      %p49 = scmp.eq.s32.totalorder %s23, 0
      %p50 = por %p48, %p49
      %s51 = ssub.s32 %s17, %s24
      %p52 = scmp.eq.s32.totalorder %s51, 0
      %s54 = sadd.s32 %s53, 1
      %s55 = scalar_select %p52, %s53, %s54
      %p58 = pneg %p52
      %p59 = scmp.eq.s32.totalorder %s17, 1
      %p60 = por %p58, %p59
      %p61 = scmp.ne.s32.totalorder %s53, %s56
      %p62 = scmp.eq.s32.totalorder %s17, 0
      %p63 = por %p61, %p62
      %p64 = scmp.ne.s32.totalorder %s53, %s56
      %p65 = scmp.eq.s32.totalorder %s22, 1
      %p66 = por %p64, %p65
      %p67 = scmp.ne.s32.totalorder %s56, %s57
      %p68 = scmp.eq.s32.totalorder %s22, 0
      %p69 = por %p67, %p68
      %p70 = scmp.ne.s32.totalorder %s56, %s57
      %p71 = scmp.eq.s32.totalorder %s23, 1
      %p72 = por %p70, %p71
      %p74 = scmp.ne.s32.totalorder %s57, %s73
      %p75 = scmp.eq.s32.totalorder %s23, 0
      %p76 = por %p74, %p75
      %s77 = ssub.s32 %s17, %s24
      %p78 = scmp.eq.s32.totalorder %s77, 0
      %s80 = sadd.s32 %s79, 1
      %s81 = scalar_select %p78, %s79, %s80
      %p84 = pneg %p78
      %p85 = scmp.eq.s32.totalorder %s17, 1
      %p86 = por %p84, %p85
      %p87 = scmp.ne.s32.totalorder %s79, %s82
      %p88 = scmp.eq.s32.totalorder %s17, 0
      %p89 = por %p87, %p88
      %p90 = scmp.ne.s32.totalorder %s79, %s82
      %p91 = scmp.eq.s32.totalorder %s22, 1
      %p92 = por %p90, %p91
      %p93 = scmp.ne.s32.totalorder %s82, %s83
      %p94 = scmp.eq.s32.totalorder %s22, 0
      %p95 = por %p93, %p94
      %p96 = scmp.ne.s32.totalorder %s82, %s83
      %p97 = scmp.eq.s32.totalorder %s23, 1
      %p98 = por %p96, %p97
      %p100 = scmp.ne.s32.totalorder %s83, %s99
      %p101 = scmp.eq.s32.totalorder %s23, 0
      %p102 = por %p100, %p101
      %p103 = scmp.le.s32.totalorder 1, %s17
      %p104 = scmp.lt.s32.totalorder %s17, 3
      %p105 = pnand %p103, %p104
      %p106 = pneg %p105
      // Predicated region
      $region9: #{tpu_custom_call.1} parent=5 // pred_check
        _
      $region10: #{tpu_custom_call.1} parent=5 // pred_check_branch
        %108 = sbr.rel (%p105) target = $region12
      $region11: #{tpu_custom_call.1} parent=5 // pred_region
        %s109 = ssub.s32 %s17, 1
      $region12: #{tpu_custom_call.1} parent=5 // pred_fallthru
        _
      %p110 = scmp.lt.s32.totalorder %s17, 2
      // Predicated region
      $region13: #{tpu_custom_call.1} parent=5 // pred_check
        %p111 = pneg %p110
      $region14: #{tpu_custom_call.1} parent=5 // pred_check_branch
        %113 = sbr.rel (%p111) target = $region16
      $region15: #{tpu_custom_call.1} parent=5 // pred_region
        // Predicated region
        $region17: #{tpu_custom_call.1} parent=15 // pred_check
          %p114 = pneg %p37
        $region18: #{tpu_custom_call.1} parent=15 // pred_check_branch
          %116 = sbr.rel (%p114) target = $region20
        $region19: #{tpu_custom_call.1} parent=15 // pred_region
          %s117 = sand.u32 %s27, 1
          %s118 = scalar_lea.sflag [#allocation3], %s117
          %s119 = sand.u32 %s27, 1
          %s120 = smul.addr %s119, 128
          %s121 = scalar_lea.vmem [#allocation2], %s120
          %s122 = smul.u32 32, %s17
          %124 = vsyncadd %s118, 0
          %s125 = smul.addr %s122, 4
          %s126 = scalar_lea.hbm %s0, %s125
          %s127 = sshll.u32 %s126, 4
          %s128 = int_to_ptr.hbm [resolvable:$true] %s127
          %s129 = sshll.u32 %s121, 4
          %s130 = int_to_ptr.vmem [resolvable:$true] %s129
          %135 = dma.hbm_to_vmem [thread:$0]  %s128, 2048, %s130, %s118, 64, 64, 4
        $region20: #{tpu_custom_call.1} parent=15 // pred_fallthru
          _
        // Predicated region
        $region21: #{tpu_custom_call.1} parent=15 // pred_check
          %p136 = pneg %p63
        $region22: #{tpu_custom_call.1} parent=15 // pred_check_branch
          %138 = sbr.rel (%p136) target = $region24
        $region23: #{tpu_custom_call.1} parent=15 // pred_region
          %s139 = sand.u32 %s53, 1
          %s140 = scalar_lea.sflag [#allocation6], %s139
          %s141 = sand.u32 %s53, 1
          %s142 = smul.addr %s141, 32
          %s143 = scalar_lea.vmem [#allocation5], %s142
          %s144 = smul.u32 32, %s17
          %146 = vsyncadd %s140, 0
          %s147 = scalar_lea.hbm %s1, %s144
          %s148 = sshll.u32 %s147, 4
          %s149 = int_to_ptr.hbm [resolvable:$true] %s148
          %s150 = sshll.u32 %s143, 4
          %s151 = int_to_ptr.vmem [resolvable:$true] %s150
          %156 = dma.hbm_to_vmem [thread:$0]  %s149, 512, %s151, %s140, 16, 16, 1
        $region24: #{tpu_custom_call.1} parent=15 // pred_fallthru
          _
      $region16: #{tpu_custom_call.1} parent=5 // pred_fallthru
        _
      %p157 = scmp.le.s32.totalorder 1, %s17
      %p158 = scmp.lt.s32.totalorder %s17, 3
      %p159 = pnand %p157, %p158
      %p160 = pneg %p159
      // Predicated region
      $region25: #{tpu_custom_call.1} parent=5 // pred_check
        _
      $region26: #{tpu_custom_call.1} parent=5 // pred_check_branch
        %162 = sbr.rel (%p159) target = $region28
      $region27: #{tpu_custom_call.1} parent=5 // pred_region
        %s163 = ssub.s32 %s17, 1
        %s164 = sand.u32 %s30, 1
        %s165 = scalar_lea.sflag [#allocation3], %s164
        %s166 = sand.u32 %s30, 1
        %s167 = smul.addr %s166, 128
        %s168 = scalar_lea.vmem [#allocation2], %s167
        // Predicated region
        $region29: #{tpu_custom_call.1} parent=27 // pred_check
          %p169 = pneg %p43
        $region30: #{tpu_custom_call.1} parent=27 // pred_check_branch
          %171 = sbr.rel (%p169) target = $region32
        $region31: #{tpu_custom_call.1} parent=27 // pred_region
          %173 = dma.done %s165, 2048
        $region32: #{tpu_custom_call.1} parent=27 // pred_fallthru
          _
        %s174 = sand.u32 %s56, 1
        %s175 = scalar_lea.sflag [#allocation6], %s174
        %s176 = sand.u32 %s56, 1
        %s177 = smul.addr %s176, 32
        %s178 = scalar_lea.vmem [#allocation5], %s177
        // Predicated region
        $region33: #{tpu_custom_call.1} parent=27 // pred_check
          %p179 = pneg %p69
        $region34: #{tpu_custom_call.1} parent=27 // pred_check_branch
          %181 = sbr.rel (%p179) target = $region36
        $region35: #{tpu_custom_call.1} parent=27 // pred_region
          %183 = dma.done %s175, 512
        $region36: #{tpu_custom_call.1} parent=27 // pred_fallthru
          _
        %s184 = sand.u32 %s30, 1
        %s185 = scalar_lea.sflag [#allocation3], %s184
        %s186 = sand.u32 %s30, 1
        %s187 = smul.addr %s186, 128
        %s188 = scalar_lea.vmem [#allocation2], %s187
        %p189 = pneg %p43
        %p190 = pneg %p40
        %s191 = sand.u32 %s56, 1
        %s192 = scalar_lea.sflag [#allocation6], %s191
        %s193 = sand.u32 %s56, 1
        %s194 = smul.addr %s193, 32
        %s195 = scalar_lea.vmem [#allocation5], %s194
        %p196 = pneg %p69
        %p197 = pneg %p66
        %p198 = pneg %p95
        %p199 = pneg %p92
        %s200 = sand.u32 %s82, 1
        %s201 = scalar_lea.sflag [#allocation4], %s200
        %s202 = sand.u32 %s82, 1
        %s203 = smul.addr %s202, 128
        %s204 = scalar_lea.vmem [#allocation7], %s203
        %s205 = smul.u32 32, %s22
        %s206 = smul.u32 32, %s22
        %s207 = smul.u32 32, %s22
        %v208 = vld [vmem:[%s168] sm:$0xf]
        %v209 = vld [vmem:[%s168 + $0x4] sm:$0xf]
        %v210 = vld [vmem:[%s168 + $0x8] sm:$0xf]
        %v211 = vld [vmem:[%s168 + $0xc] sm:$0xf]
        %v212 = vld [vmem:[%s168 + $0x10] sm:$0xf]
        %v213 = vld [vmem:[%s168 + $0x14] sm:$0xf]
        %v214 = vld [vmem:[%s168 + $0x18] sm:$0xf]
        %v215 = vld [vmem:[%s168 + $0x1c] sm:$0xf]
        %v216 = vld [vmem:[%s168 + $0x20] sm:$0xf]
        %v217 = vld [vmem:[%s168 + $0x24] sm:$0xf]
        %v218 = vld [vmem:[%s168 + $0x28] sm:$0xf]
        %v219 = vld [vmem:[%s168 + $0x2c] sm:$0xf]
        %v220 = vld [vmem:[%s168 + $0x30] sm:$0xf]
        %v221 = vld [vmem:[%s168 + $0x34] sm:$0xf]
        %v222 = vld [vmem:[%s168 + $0x38] sm:$0xf]
        %v223 = vld [vmem:[%s168 + $0x3c] sm:$0xf]
        %v224 = vld [vmem:[%s168 + $0x40] sm:$0xf]
        %v225 = vld [vmem:[%s168 + $0x44] sm:$0xf]
        %v226 = vld [vmem:[%s168 + $0x48] sm:$0xf]
        %v227 = vld [vmem:[%s168 + $0x4c] sm:$0xf]
        %v228 = vld [vmem:[%s168 + $0x50] sm:$0xf]
        %v229 = vld [vmem:[%s168 + $0x54] sm:$0xf]
        %v230 = vld [vmem:[%s168 + $0x58] sm:$0xf]
        %v231 = vld [vmem:[%s168 + $0x5c] sm:$0xf]
        %v232 = vld [vmem:[%s168 + $0x60] sm:$0xf]
        %v233 = vld [vmem:[%s168 + $0x64] sm:$0xf]
        %v234 = vld [vmem:[%s168 + $0x68] sm:$0xf]
        %v235 = vld [vmem:[%s168 + $0x6c] sm:$0xf]
        %v236 = vld [vmem:[%s168 + $0x70] sm:$0xf]
        %v237 = vld [vmem:[%s168 + $0x74] sm:$0xf]
        %v238 = vld [vmem:[%s168 + $0x78] sm:$0xf]
        %v239 = vld [vmem:[%s168 + $0x7c] sm:$0xf]
        %v240 = vld [vmem:[%s178] sm:$0x1]
        %v241 = vld [vmem:[%s178 + $0x1] sm:$0x1]
        %v242 = vld [vmem:[%s178 + $0x2] sm:$0x1]
        %v243 = vld [vmem:[%s178 + $0x3] sm:$0x1]
        %v244 = vld [vmem:[%s178 + $0x4] sm:$0x1]
        %v245 = vld [vmem:[%s178 + $0x5] sm:$0x1]
        %v246 = vld [vmem:[%s178 + $0x6] sm:$0x1]
        %v247 = vld [vmem:[%s178 + $0x7] sm:$0x1]
        %v248 = vld [vmem:[%s178 + $0x8] sm:$0x1]
        %v249 = vld [vmem:[%s178 + $0x9] sm:$0x1]
        %v250 = vld [vmem:[%s178 + $0xa] sm:$0x1]
        %v251 = vld [vmem:[%s178 + $0xb] sm:$0x1]
        %v252 = vld [vmem:[%s178 + $0xc] sm:$0x1]
        %v253 = vld [vmem:[%s178 + $0xd] sm:$0x1]
        %v254 = vld [vmem:[%s178 + $0xe] sm:$0x1]
        %v255 = vld [vmem:[%s178 + $0xf] sm:$0x1]
        %v256 = vld [vmem:[%s178 + $0x10] sm:$0x1]
        %v257 = vld [vmem:[%s178 + $0x11] sm:$0x1]
        %v258 = vld [vmem:[%s178 + $0x12] sm:$0x1]
        %v259 = vld [vmem:[%s178 + $0x13] sm:$0x1]
        %v260 = vld [vmem:[%s178 + $0x14] sm:$0x1]
        %v261 = vld [vmem:[%s178 + $0x15] sm:$0x1]
        %v262 = vld [vmem:[%s178 + $0x16] sm:$0x1]
        %v263 = vld [vmem:[%s178 + $0x17] sm:$0x1]
        %v264 = vld [vmem:[%s178 + $0x18] sm:$0x1]
        %v265 = vld [vmem:[%s178 + $0x19] sm:$0x1]
        %v266 = vld [vmem:[%s178 + $0x1a] sm:$0x1]
        %v267 = vld [vmem:[%s178 + $0x1b] sm:$0x1]
        %v268 = vld [vmem:[%s178 + $0x1c] sm:$0x1]
        %v269 = vld [vmem:[%s178 + $0x1d] sm:$0x1]
        %v270 = vld [vmem:[%s178 + $0x1e] sm:$0x1]
        %v271 = vld [vmem:[%s178 + $0x1f] sm:$0x1]
        %v304 = vperm.slane %v240, 0
        %v305 = vperm.slane %v241, 0
        %v306 = vperm.slane %v242, 0
        %v307 = vperm.slane %v243, 0
        %v308 = vperm.slane %v244, 0
        %v309 = vperm.slane %v245, 0
        %v310 = vperm.slane %v246, 0
        %v311 = vperm.slane %v247, 0
        %v312 = vperm.slane %v248, 0
        %v313 = vperm.slane %v249, 0
        %v314 = vperm.slane %v250, 0
        %v315 = vperm.slane %v251, 0
        %v316 = vperm.slane %v252, 0
        %v317 = vperm.slane %v253, 0
        %v318 = vperm.slane %v254, 0
        %v319 = vperm.slane %v255, 0
        %v320 = vperm.slane %v256, 0
        %v321 = vperm.slane %v257, 0
        %v322 = vperm.slane %v258, 0
        %v323 = vperm.slane %v259, 0
        %v324 = vperm.slane %v260, 0
        %v325 = vperm.slane %v261, 0
        %v326 = vperm.slane %v262, 0
        %v327 = vperm.slane %v263, 0
        %v328 = vperm.slane %v264, 0
        %v329 = vperm.slane %v265, 0
        %v330 = vperm.slane %v266, 0
        %v331 = vperm.slane %v267, 0
        %v332 = vperm.slane %v268, 0
        %v333 = vperm.slane %v269, 0
        %v334 = vperm.slane %v270, 0
        %v335 = vperm.slane %v271, 0
        %v368 = vadd.f32 %v208, %v304
        %v369 = vadd.f32 %v209, %v305
        %v370 = vadd.f32 %v210, %v306
        %v371 = vadd.f32 %v211, %v307
        %v372 = vadd.f32 %v212, %v308
        %v373 = vadd.f32 %v213, %v309
        %v374 = vadd.f32 %v214, %v310
        %v375 = vadd.f32 %v215, %v311
        %v376 = vadd.f32 %v216, %v312
        %v377 = vadd.f32 %v217, %v313
        %v378 = vadd.f32 %v218, %v314
        %v379 = vadd.f32 %v219, %v315
        %v380 = vadd.f32 %v220, %v316
        %v381 = vadd.f32 %v221, %v317
        %v382 = vadd.f32 %v222, %v318
        %v383 = vadd.f32 %v223, %v319
        %v384 = vadd.f32 %v224, %v320
        %v385 = vadd.f32 %v225, %v321
        %v386 = vadd.f32 %v226, %v322
        %v387 = vadd.f32 %v227, %v323
        %v388 = vadd.f32 %v228, %v324
        %v389 = vadd.f32 %v229, %v325
        %v390 = vadd.f32 %v230, %v326
        %v391 = vadd.f32 %v231, %v327
        %v392 = vadd.f32 %v232, %v328
        %v393 = vadd.f32 %v233, %v329
        %v394 = vadd.f32 %v234, %v330
        %v395 = vadd.f32 %v235, %v331
        %v396 = vadd.f32 %v236, %v332
        %v397 = vadd.f32 %v237, %v333
        %v398 = vadd.f32 %v238, %v334
        %v399 = vadd.f32 %v239, %v335
        %400 = vst [vmem:[%s204] sm:$0xf] %v368
        %401 = vst [vmem:[%s204 + $0x4] sm:$0xf] %v369
        %402 = vst [vmem:[%s204 + $0x8] sm:$0xf] %v370
        %403 = vst [vmem:[%s204 + $0xc] sm:$0xf] %v371
        %404 = vst [vmem:[%s204 + $0x10] sm:$0xf] %v372
        %405 = vst [vmem:[%s204 + $0x14] sm:$0xf] %v373
        %406 = vst [vmem:[%s204 + $0x18] sm:$0xf] %v374
        %407 = vst [vmem:[%s204 + $0x1c] sm:$0xf] %v375
        %408 = vst [vmem:[%s204 + $0x20] sm:$0xf] %v376
        %409 = vst [vmem:[%s204 + $0x24] sm:$0xf] %v377
        %410 = vst [vmem:[%s204 + $0x28] sm:$0xf] %v378
        %411 = vst [vmem:[%s204 + $0x2c] sm:$0xf] %v379
        %412 = vst [vmem:[%s204 + $0x30] sm:$0xf] %v380
        %413 = vst [vmem:[%s204 + $0x34] sm:$0xf] %v381
        %414 = vst [vmem:[%s204 + $0x38] sm:$0xf] %v382
        %415 = vst [vmem:[%s204 + $0x3c] sm:$0xf] %v383
        %416 = vst [vmem:[%s204 + $0x40] sm:$0xf] %v384
        %417 = vst [vmem:[%s204 + $0x44] sm:$0xf] %v385
        %418 = vst [vmem:[%s204 + $0x48] sm:$0xf] %v386
        %419 = vst [vmem:[%s204 + $0x4c] sm:$0xf] %v387
        %420 = vst [vmem:[%s204 + $0x50] sm:$0xf] %v388
        %421 = vst [vmem:[%s204 + $0x54] sm:$0xf] %v389
        %422 = vst [vmem:[%s204 + $0x58] sm:$0xf] %v390
        %423 = vst [vmem:[%s204 + $0x5c] sm:$0xf] %v391
        %424 = vst [vmem:[%s204 + $0x60] sm:$0xf] %v392
        %425 = vst [vmem:[%s204 + $0x64] sm:$0xf] %v393
        %426 = vst [vmem:[%s204 + $0x68] sm:$0xf] %v394
        %427 = vst [vmem:[%s204 + $0x6c] sm:$0xf] %v395
        %428 = vst [vmem:[%s204 + $0x70] sm:$0xf] %v396
        %429 = vst [vmem:[%s204 + $0x74] sm:$0xf] %v397
        %430 = vst [vmem:[%s204 + $0x78] sm:$0xf] %v398
        %431 = vst [vmem:[%s204 + $0x7c] sm:$0xf] %v399
        %s432 = sand.u32 %s82, 1
        %s433 = scalar_lea.sflag [#allocation4], %s432
        %s434 = sand.u32 %s82, 1
        %s435 = smul.addr %s434, 128
        %s436 = scalar_lea.vmem [#allocation7], %s435
        // Predicated region
        $region37: #{tpu_custom_call.1} parent=27 // pred_check
          %p437 = pneg %p92
        $region38: #{tpu_custom_call.1} parent=27 // pred_check_branch
          %439 = sbr.rel (%p437) target = $region40
        $region39: #{tpu_custom_call.1} parent=27 // pred_region
          %s440 = smul.u32 32, %s22
          %442 = vsyncadd %s433, 0
          %s443 = smul.addr %s440, 4
          %s444 = scalar_lea.hbm %s2, %s443
          %s445 = sshll.u32 %s436, 4
          %s446 = int_to_ptr.vmem [resolvable:$true] %s445
          %s447 = sshll.u32 %s444, 4
          %s448 = int_to_ptr.hbm [resolvable:$true] %s447
          %453 = dma.vmem_to_hbm [thread:$0]  %s446, 2048, %s448, %s433, 64, 64, 4
        $region40: #{tpu_custom_call.1} parent=27 // pred_fallthru
          _
      $region28: #{tpu_custom_call.1} parent=5 // pred_fallthru
        _
      %p454 = scmp.le.s32.totalorder 2, %s17
      // Predicated region
      $region41: #{tpu_custom_call.1} parent=5 // pred_check
        %p455 = pneg %p454
      $region42: #{tpu_custom_call.1} parent=5 // pred_check_branch
        %457 = sbr.rel (%p455) target = $region44
      $region43: #{tpu_custom_call.1} parent=5 // pred_region
        %s458 = ssub.s32 %s17, 2
        // Predicated region
        $region45: #{tpu_custom_call.1} parent=43 // pred_check
          %p459 = pneg %p98
        $region46: #{tpu_custom_call.1} parent=43 // pred_check_branch
          %461 = sbr.rel (%p459) target = $region48
        $region47: #{tpu_custom_call.1} parent=43 // pred_region
          %s462 = sand.u32 %s83, 1
          %s463 = scalar_lea.sflag [#allocation4], %s462
          %s464 = sand.u32 %s83, 1
          %s465 = smul.addr %s464, 128
          %s466 = scalar_lea.vmem [#allocation7], %s465
          %468 = dma.done %s463, 2048
        $region48: #{tpu_custom_call.1} parent=43 // pred_fallthru
          _
      $region44: #{tpu_custom_call.1} parent=5 // pred_fallthru
        _
    $region6: #{tpu_custom_call.1} parent=1 // loop_footer
      %s21 = sadd.s32 1, %s17
    $region7: #{tpu_custom_call.1} parent=1 // loop_footer_branch
      %16 = sbr.rel target = $region3
    $region8: #{tpu_custom_call.1} parent=1 // loop_exit
      _
    %469 = vsyncpa [#allocation3], 1
    %s470 = scalar_lea.sflag [#allocation3], 1
    %471 = vsyncpa %s470, 1
    %472 = vsyncpa [#allocation6], 1
    %s473 = scalar_lea.sflag [#allocation6], 1
    %474 = vsyncpa %s473, 1
    %475 = vsyncpa [#allocation4], 1
    %s476 = scalar_lea.sflag [#allocation4], 1
    %477 = vsyncpa %s476, 1

</llo_original>
